<compile_context>
chip_gen: v7x
topology: tpu7x:2x2x1
jax: 0.10.0
libtpu: 0.0.40
codegen_flags: <defaults>
</compile_context>

<pallas_src>
import math

import jax
import jax.numpy as jnp
from jax import lax
from jax.experimental import pallas as pl
from jax.experimental.pallas import tpu as pltpu


def _ccs_kernel(x_ref, w_ref, b_ref, o_ref):
    """One row-tile per grid step.

    x_ref : (tm, H_in)     streamed input rows (VMEM)
    w_ref : (H_out, H_in)  PyTorch Linear weight, consumed as (out, in)
    b_ref : (1, H_out)     bias
    o_ref : (tm, H_out)    output rows
    """
    acc = lax.dot_general(
        x_ref[...], w_ref[...],
        dimension_numbers=(((1,), (1,)), ((), ())),   # x @ W^T on the MXU
        preferred_element_type=jnp.float32)           # f32 accumulation
    o_ref[...] = (acc + b_ref[...].astype(jnp.float32)).astype(o_ref.dtype)


def _round_up(x, m):
    return ((x + m - 1) // m) * m


def ccs_forward(x, weight, bias, *, tm=2048):
    """Pallas forward for CCS.

    x      : (..., H)   e.g. (B, W, D, S, N, H)
    weight : (H, H)     PyTorch Linear weight (out_features, in_features)
    bias   : (H,)
    returns: same shape/dtype as x
    """
    *lead, H = x.shape
    M = math.prod(lead) if lead else 1

    # ---- glue: flatten leading dims (contiguous reshape only, no pad) ----
    x2 = x.reshape(M, H)
    b_k = bias.reshape(1, H)

    # Row tile: large (HBM-bandwidth-bound kernel), multiple of 8, capped at
    # 4096 (keeps double-buffered tiles inside v5e's 16 MiB scoped default for
    # H=128), and clamped so the grid has at least 2 steps so v7x's two
    # TensorCores (sharing 3.2 TB/s HBM) both get work via the parallel axis.
    tm = max(8, (int(tm) // 8) * 8)
    tm = min(tm, 4096)
    tm_eff = max(8, min(tm, _round_up(pl.cdiv(M, 2), 8)))

    grid = (pl.cdiv(M, tm_eff),)   # ragged last block handled by Pallas

    itemsize = jnp.dtype(x.dtype).itemsize
    cost = pl.CostEstimate(
        flops=2 * M * H * H,
        transcendentals=0,
        bytes_accessed=(2 * M * H + H * H + H) * itemsize)

    # Working set: in/out tiles double-buffered + resident weight/bias (also
    # double-buffered by BlockSpec).  Only raise the scoped-VMEM limit when
    # the default (16 MiB on v5e) would not fit.
    vmem_need = 2 * (2 * tm_eff * H + H * H + H) * itemsize
    vmem_limit = None
    if vmem_need > (14 << 20):
        vmem_limit = min(int(vmem_need * 1.5) + (2 << 20), 100 << 20)

    out = pl.pallas_call(
        _ccs_kernel,
        out_shape=jax.ShapeDtypeStruct((M, H), x.dtype),
        grid_spec=pltpu.PrefetchScalarGridSpec(
            num_scalar_prefetch=0,
            grid=grid,
            in_specs=[
                pl.BlockSpec((tm_eff, H), lambda i: (i, 0)),   # streamed rows
                pl.BlockSpec((H, H), lambda i: (0, 0)),        # resident weight
                pl.BlockSpec((1, H), lambda i: (0, 0)),        # resident bias
            ],
            out_specs=pl.BlockSpec((tm_eff, H), lambda i: (i, 0)),
        ),
        compiler_params=pltpu.CompilerParams(
            dimension_semantics=("parallel",),                 # megacore shard
            vmem_limit_bytes=vmem_limit),
        cost_estimate=cost,
    )(x2, weight, b_k)

    return out.reshape(*lead, H)


def _reference(x, weight, bias):
    """Pure-JAX reference matching PyTorch nn.Linear semantics."""
    return jnp.einsum("...i,oi->...o", x, weight) + bias


if __name__ == "__main__":
    # Small shapes consistent with the module: x is (B, W, D, S, N, H), H = hwd.
    B, Wd, D, S, N = 2, 4, 4, 4, 3
    hwd = 128                                   # lane-dense feature dim

    key = jax.random.PRNGKey(0)
    k1, k2, k3 = jax.random.split(key, 3)

    x = jax.random.normal(k1, (B, Wd, D, S, N, hwd), jnp.float32)
    weight = jax.random.normal(k2, (hwd, hwd), jnp.float32) * 0.05
    bias = jax.random.normal(k3, (hwd,), jnp.float32) * 0.05

    out = ccs_forward(x, weight, bias)
    out = jax.block_until_ready(out)

    ref = jax.block_until_ready(_reference(x, weight, bias))

    assert out.shape == x.shape, out.shape
    assert jnp.allclose(out, ref, atol=1e-4, rtol=1e-4), float(
        jnp.max(jnp.abs(out - ref)))
    print("KERNEL_OK")
</pallas_src>

<mosaic_0001>
module attributes {stable_mosaic.version = 11 : i64} {
  func.func @_ccs_kernel(%arg0: i32, %arg1: memref<192x128xf32, #tpu.memory_space<vmem>>, %arg2: memref<128x128xf32, #tpu.memory_space<vmem>>, %arg3: memref<1x128xf32, #tpu.memory_space<vmem>>, %arg4: memref<192x128xf32, #tpu.memory_space<vmem>>) attributes {dimension_semantics = [#tpu.dimension_semantics<parallel>], iteration_bounds = array<i64: 2>, scalar_prefetch = 0 : i64, scratch_operands = 0 : i64, tpu.core_type = #tpu.core_type<tc>, window_params = [{transform_indices = @transform_0, window_bounds = array<i64: 192, 128>}, {pipeline_mode = #tpu.pipeline_mode<synchronous>, transform_indices = @transform_1, window_bounds = array<i64: 128, 128>}, {pipeline_mode = #tpu.pipeline_mode<synchronous>, transform_indices = @transform_2, window_bounds = array<i64: 1, 128>}, {transform_indices = @transform_3, window_bounds = array<i64: 192, 128>}]} {
    %c0 = arith.constant 0 : index
    %c0_0 = arith.constant 0 : index
    %0 = vector.load %arg1[%c0, %c0_0] : memref<192x128xf32, #tpu.memory_space<vmem>>, vector<192x128xf32>
    %c0_1 = arith.constant 0 : index
    %c0_2 = arith.constant 0 : index
    %1 = vector.load %arg2[%c0_1, %c0_2] : memref<128x128xf32, #tpu.memory_space<vmem>>, vector<128x128xf32>
    %cst = arith.constant dense<0.000000e+00> : vector<192x128xf32>
    %2 = tpu.matmul %0, %1, %cst {dimension_numbers = #tpu.dot_dimension_numbers<[1], [1], [0], [0], [0, 0, 1, 0], [], []>} : vector<192x128xf32>, vector<128x128xf32>, vector<192x128xf32> -> vector<192x128xf32>
    %c0_3 = arith.constant 0 : index
    %c0_4 = arith.constant 0 : index
    %3 = vector.load %arg3[%c0_3, %c0_4] : memref<1x128xf32, #tpu.memory_space<vmem>>, vector<1x128xf32>
    %4 = vector.broadcast %3 : vector<1x128xf32> to vector<192x128xf32>
    %5 = arith.addf %2, %4 : vector<192x128xf32>
    %c0_5 = arith.constant 0 : index
    %c0_6 = arith.constant 0 : index
    %6 = vector.load %arg4[%c0_5, %c0_6] : memref<192x128xf32, #tpu.memory_space<vmem>>, vector<192x128xf32>
    tpu.vector_store %arg4[%c0_5, %c0_6], %5 {strides = array<i32>} : memref<192x128xf32, #tpu.memory_space<vmem>>, vector<192x128xf32>,
    return
  }
  func.func @transform_0(%arg0: i32) -> (i32, i32) {
    %c0_i32 = arith.constant 0 : i32
    %c0_i32_0 = arith.constant 0 : i32
    return %arg0, %c0_i32 : i32, i32
  }
  func.func @transform_1(%arg0: i32) -> (i32, i32) {
    %c0_i32 = arith.constant 0 : i32
    %c0_i32_0 = arith.constant 0 : i32
    %c0_i32_1 = arith.constant 0 : i32
    return %c0_i32, %c0_i32_0 : i32, i32
  }
  func.func @transform_2(%arg0: i32) -> (i32, i32) {
    %c0_i32 = arith.constant 0 : i32
    %c0_i32_0 = arith.constant 0 : i32
    %c0_i32_1 = arith.constant 0 : i32
    return %c0_i32, %c0_i32_0 : i32, i32
  }
  func.func @transform_3(%arg0: i32) -> (i32, i32) {
    %c0_i32 = arith.constant 0 : i32
    %c0_i32_0 = arith.constant 0 : i32
    return %arg0, %c0_i32 : i32, i32
  }
}

</mosaic_0001>

<llo_original>
// kernel: tpu_custom_call.1
$region0: #{tpu_custom_call.1}
  #allocation0 [shape = 'u32[]', space=smem, size = 0x4, offset = 0x4, fixed_abs, tag = 'smem constant byte address 0x4 - core index']
  #allocation1 [shape = 'u32[144,128]{1,0:T(1,128)}', space=vmem, size = 0x12000, scoped, tag = 'internal scratch']
  %s0 = inlined_call_operand.hbm [shape: f32[384,128], index: 0, kind: input, shape index: {}]
  %s1 = inlined_call_operand.hbm [shape: f32[128,128], index: 1, kind: input, shape index: {}]
  %s2 = inlined_call_operand.vmem [shape: f32[1,128], index: 2, kind: input, shape index: {}]
  %s3 = inlined_call_operand.hbm [shape: f32[384,128], index: 3, kind: output, shape index: {}]
  %s4 = sld [smem:[#allocation0]]
  $region53: #{tpu_custom_call.1} parent=0
    _
  %s6 = ssub.s32 1, %s4
  %s7 = scalar_select 0, %s6, %s4
  $region1: #{tpu_custom_call.1} parent=0
    #allocation2 [shape = 'u8[196608]{0}', space=vmem, size = 0x30000, scoped, tag = 'input window, operand 0']
    #allocation3 [shape = 's32[2]{0}', space=sflag, size = 0x8, scoped, tag = 'scoped memory for tpu_custom_call.1']
    #allocation4 [shape = 's32[2]{0}', space=sflag, size = 0x8, scoped, tag = 'scoped memory for tpu_custom_call.1']
    #allocation5 [shape = 'u8[65536]{0}', space=vmem, size = 0x10000, scoped, tag = 'input window, operand 1, single buffered']
    #allocation6 [shape = 's32[1]{0}', space=sflag, size = 0x4, scoped, tag = 'scoped memory for tpu_custom_call.1']
    #allocation7 [shape = 'u8[196608]{0}', space=vmem, size = 0x30000, scoped, tag = 'output window, operand 0']
    %8 = vsyncpa [#allocation3], 0
    %s9 = scalar_lea.sflag [#allocation3], 1
    %10 = vsyncpa %s9, 0
    %11 = vsyncpa [#allocation6], 0
    %12 = vsyncpa [#allocation4], 0
    %s13 = scalar_lea.sflag [#allocation4], 1
    %14 = vsyncpa %s13, 0
    loop: start=0, step=1, limit=4
    $region2: #{tpu_custom_call.1} parent=1 // loop_pre_header
      _
    $region3: #{tpu_custom_call.1} parent=1 // loop_header
      %s16 = sphi 0, %s20
      %p17 = scmp.ge.s32.totalorder %s16, 4
      %s26 = sphi 0, %s28
      %s29 = sphi 0, %s26
      %s30 = sphi 0, %s29
      %s46 = sphi 0, %s30
      %s50 = sphi 0, %s50
      %s52 = sphi 0, %s50
      %s53 = sphi 0, %s52
      %s67 = sphi 0, %s53
      %s71 = sphi 0, %s71
      %s73 = sphi 0, %s71
      %s74 = sphi 0, %s73
      %s88 = sphi 0, %s74
      %s94 = sphi 0, %s96
      %s97 = sphi 0, %s94
      %s98 = sphi 0, %s97
      %s114 = sphi 0, %s98
    $region4: #{tpu_custom_call.1} parent=1 // loop_header_branch
      %19 = sbr.rel (%p17) target = $region8
    $region5: #{tpu_custom_call.1} parent=1 // loop_body
      %s21 = ssub.s32 %s16, 1
      %s22 = ssub.s32 %s16, 2
      %s23 = sadd.s32 %s16, 1
      %s24 = ssub.s32 %s16, %s23
      %p25 = scmp.eq.s32.totalorder %s24, 0
      %s27 = sadd.s32 %s26, 1
      %s28 = scalar_select %p25, %s26, %s27
      %p31 = pneg %p25
      %p32 = scmp.eq.s32.totalorder %s16, 1
      %p33 = por %p31, %p32
      %p34 = scmp.ne.s32.totalorder %s26, %s29
      %p35 = scmp.eq.s32.totalorder %s16, 0
      %p36 = por %p34, %p35
      %p37 = scmp.ne.s32.totalorder %s26, %s29
      %p38 = scmp.eq.s32.totalorder %s21, 1
      %p39 = por %p37, %p38
      %p40 = scmp.ne.s32.totalorder %s29, %s30
      %p41 = scmp.eq.s32.totalorder %s21, 0
      %p42 = por %p40, %p41
      %p43 = scmp.ne.s32.totalorder %s29, %s30
      %p44 = scmp.eq.s32.totalorder %s22, 1
      %p45 = por %p43, %p44
      %p47 = scmp.ne.s32.totalorder %s30, %s46
      %p48 = scmp.eq.s32.totalorder %s22, 0
      %p49 = por %p47, %p48
      %s51 = sadd.s32 %s50, 1
      %p54 = scmp.eq.s32.totalorder %s16, 1
      %p55 = scmp.ne.s32.totalorder %s50, %s52
      %p56 = scmp.eq.s32.totalorder %s16, 0
      %p57 = por %p55, %p56
      %p58 = scmp.ne.s32.totalorder %s50, %s52
      %p59 = scmp.eq.s32.totalorder %s21, 1
      %p60 = por %p58, %p59
      %p61 = scmp.ne.s32.totalorder %s52, %s53
      %p62 = scmp.eq.s32.totalorder %s21, 0
      %p63 = por %p61, %p62
      %p64 = scmp.ne.s32.totalorder %s52, %s53
      %p65 = scmp.eq.s32.totalorder %s22, 1
      %p66 = por %p64, %p65
      %p68 = scmp.ne.s32.totalorder %s53, %s67
      %p69 = scmp.eq.s32.totalorder %s22, 0
      %p70 = por %p68, %p69
      %s72 = sadd.s32 %s71, 1
      %p75 = scmp.eq.s32.totalorder %s16, 1
      %p76 = scmp.ne.s32.totalorder %s71, %s73
      %p77 = scmp.eq.s32.totalorder %s16, 0
      %p78 = por %p76, %p77
      %p79 = scmp.ne.s32.totalorder %s71, %s73
      %p80 = scmp.eq.s32.totalorder %s21, 1
      %p81 = por %p79, %p80
      %p82 = scmp.ne.s32.totalorder %s73, %s74
      %p83 = scmp.eq.s32.totalorder %s21, 0
      %p84 = por %p82, %p83
      %p85 = scmp.ne.s32.totalorder %s73, %s74
      %p86 = scmp.eq.s32.totalorder %s22, 1
      %p87 = por %p85, %p86
      %p89 = scmp.ne.s32.totalorder %s74, %s88
      %p90 = scmp.eq.s32.totalorder %s22, 0
      %p91 = por %p89, %p90
      %s92 = ssub.s32 %s16, %s23
      %p93 = scmp.eq.s32.totalorder %s92, 0
      %s95 = sadd.s32 %s94, 1
      %s96 = scalar_select %p93, %s94, %s95
      %p99 = pneg %p93
      %p100 = scmp.eq.s32.totalorder %s16, 1
      %p101 = por %p99, %p100
      %p102 = scmp.ne.s32.totalorder %s94, %s97
      %p103 = scmp.eq.s32.totalorder %s16, 0
      %p104 = por %p102, %p103
      %p105 = scmp.ne.s32.totalorder %s94, %s97
      %p106 = scmp.eq.s32.totalorder %s21, 1
      %p107 = por %p105, %p106
      %p108 = scmp.ne.s32.totalorder %s97, %s98
      %p109 = scmp.eq.s32.totalorder %s21, 0
      %p110 = por %p108, %p109
      %p111 = scmp.ne.s32.totalorder %s97, %s98
      %p112 = scmp.eq.s32.totalorder %s22, 1
      %p113 = por %p111, %p112
      %p115 = scmp.ne.s32.totalorder %s98, %s114
      %p116 = scmp.eq.s32.totalorder %s22, 0
      %p117 = por %p115, %p116
      %p118 = scmp.le.s32.totalorder 1, %s16
      %p119 = scmp.lt.s32.totalorder %s16, 3
      %p120 = pnand %p118, %p119
      %p121 = pneg %p120
      // Predicated region
      $region9: #{tpu_custom_call.1} parent=5 // pred_check
        _
      $region10: #{tpu_custom_call.1} parent=5 // pred_check_branch
        %123 = sbr.rel (%p120) target = $region12
      $region11: #{tpu_custom_call.1} parent=5 // pred_region
        %s124 = ssub.s32 %s16, 1
        // Predicated region
        $region13: #{tpu_custom_call.1} parent=11 // pred_check
          %p125 = pneg %p63
        $region14: #{tpu_custom_call.1} parent=11 // pred_check_branch
          %127 = sbr.rel (%p125) target = $region16
        $region15: #{tpu_custom_call.1} parent=11 // pred_region
          %s129 = ssub.s32 2048, 2048
          %130 = vsyncadd [#allocation6], %s129
          %s131 = sshll.u32 [#allocation5], 4
          %s132 = int_to_ptr.vmem [resolvable:$true] %s131
          %137 = dma.hbm_to_vmem [thread:$0]  %s1, 2048, %s132, [#allocation6], 128, 128, 8
        $region16: #{tpu_custom_call.1} parent=11 // pred_fallthru
          _
        // Predicated region
        $region17: #{tpu_custom_call.1} parent=11 // pred_check
          %p138 = pneg %p84
        $region18: #{tpu_custom_call.1} parent=11 // pred_check_branch
          %140 = sbr.rel (%p138) target = $region20
        $region19: #{tpu_custom_call.1} parent=11 // pred_region
          _
        $region20: #{tpu_custom_call.1} parent=11 // pred_fallthru
          _
      $region12: #{tpu_custom_call.1} parent=5 // pred_fallthru
        _
      %p141 = scmp.lt.s32.totalorder %s16, 2
      // Predicated region
      $region21: #{tpu_custom_call.1} parent=5 // pred_check
        %p142 = pneg %p141
      $region22: #{tpu_custom_call.1} parent=5 // pred_check_branch
        %144 = sbr.rel (%p142) target = $region24
      $region23: #{tpu_custom_call.1} parent=5 // pred_region
        // Predicated region
        $region25: #{tpu_custom_call.1} parent=23 // pred_check
          %p145 = pneg %p36
        $region26: #{tpu_custom_call.1} parent=23 // pred_check_branch
          %147 = sbr.rel (%p145) target = $region28
        $region27: #{tpu_custom_call.1} parent=23 // pred_region
          %s148 = sand.u32 %s26, 1
          %s149 = scalar_lea.sflag [#allocation3], %s148
          %s150 = sand.u32 %s26, 1
          %s151 = smul.addr %s150, 192
          %s152 = scalar_lea.vmem [#allocation2], %s151
          %s153 = smul.u32 24, %s16
          %s155 = ssub.s32 3072, 3072
          %156 = vsyncadd %s149, %s155
          %s157 = smul.addr %s153, 128
          %s158 = scalar_lea.hbm %s0, %s157
          %s159 = sshll.u32 %s152, 4
          %s160 = int_to_ptr.vmem [resolvable:$true] %s159
          %165 = dma.hbm_to_vmem [thread:$0]  %s158, 3072, %s160, %s149, 128, 128, 8
        $region28: #{tpu_custom_call.1} parent=23 // pred_fallthru
          _
      $region24: #{tpu_custom_call.1} parent=5 // pred_fallthru
        _
      %p166 = scmp.le.s32.totalorder 1, %s16
      %p167 = scmp.lt.s32.totalorder %s16, 3
      %p168 = pnand %p166, %p167
      %p169 = pneg %p168
      // Predicated region
      $region29: #{tpu_custom_call.1} parent=5 // pred_check
        _
      $region30: #{tpu_custom_call.1} parent=5 // pred_check_branch
        %171 = sbr.rel (%p168) target = $region32
      $region31: #{tpu_custom_call.1} parent=5 // pred_region
        %s172 = ssub.s32 %s16, 1
        %s173 = sand.u32 %s29, 1
        %s174 = scalar_lea.sflag [#allocation3], %s173
        %s175 = sand.u32 %s29, 1
        %s176 = smul.addr %s175, 192
        %s177 = scalar_lea.vmem [#allocation2], %s176
        // Predicated region
        $region33: #{tpu_custom_call.1} parent=31 // pred_check
          %p178 = pneg %p42
        $region34: #{tpu_custom_call.1} parent=31 // pred_check_branch
          %180 = sbr.rel (%p178) target = $region36
        $region35: #{tpu_custom_call.1} parent=31 // pred_region
          %181 = dma.done %s174, 3072
        $region36: #{tpu_custom_call.1} parent=31 // pred_fallthru
          _
        // Predicated region
        $region37: #{tpu_custom_call.1} parent=31 // pred_check
          %p182 = pneg %p63
        $region38: #{tpu_custom_call.1} parent=31 // pred_check_branch
          %184 = sbr.rel (%p182) target = $region40
        $region39: #{tpu_custom_call.1} parent=31 // pred_region
          %185 = dma.done [#allocation6], 2048
        $region40: #{tpu_custom_call.1} parent=31 // pred_fallthru
          _
        %s186 = sand.u32 %s29, 1
        %s187 = scalar_lea.sflag [#allocation3], %s186
        %s188 = sand.u32 %s29, 1
        %s189 = smul.addr %s188, 192
        %s190 = scalar_lea.vmem [#allocation2], %s189
        %p191 = pneg %p42
        %p192 = pneg %p39
        %p193 = pneg %p63
        %p194 = pneg %p60
        %p195 = pneg %p84
        %p196 = pneg %p81
        %p197 = pneg %p110
        %p198 = pneg %p107
        %s199 = sand.u32 %s97, 1
        %s200 = scalar_lea.sflag [#allocation4], %s199
        %s201 = sand.u32 %s97, 1
        %s202 = smul.addr %s201, 192
        %s203 = scalar_lea.vmem [#allocation7], %s202
        %s204 = smul.u32 24, %s21
        %s205 = smul.u32 24, %s21
        %v206 = vld [vmem:[%s177] sm:$0xff]
        %v207 = vld [vmem:[%s177 + $0x8] sm:$0xff]
        %v208 = vld [vmem:[%s177 + $0x10] sm:$0xff]
        %v209 = vld [vmem:[%s177 + $0x18] sm:$0xff]
        %v210 = vld [vmem:[%s177 + $0x20] sm:$0xff]
        %v211 = vld [vmem:[%s177 + $0x28] sm:$0xff]
        %v212 = vld [vmem:[%s177 + $0x30] sm:$0xff]
        %v213 = vld [vmem:[%s177 + $0x38] sm:$0xff]
        %v214 = vld [vmem:[%s177 + $0x40] sm:$0xff]
        %v215 = vld [vmem:[%s177 + $0x48] sm:$0xff]
        %v216 = vld [vmem:[%s177 + $0x50] sm:$0xff]
        %v217 = vld [vmem:[%s177 + $0x58] sm:$0xff]
        %v218 = vld [vmem:[%s177 + $0x60] sm:$0xff]
        %v219 = vld [vmem:[%s177 + $0x68] sm:$0xff]
        %v220 = vld [vmem:[%s177 + $0x70] sm:$0xff]
        %v221 = vld [vmem:[%s177 + $0x78] sm:$0xff]
        %v222 = vld [vmem:[%s177 + $0x80] sm:$0xff]
        %v223 = vld [vmem:[%s177 + $0x88] sm:$0xff]
        %v224 = vld [vmem:[%s177 + $0x90] sm:$0xff]
        %v225 = vld [vmem:[%s177 + $0x98] sm:$0xff]
        %v226 = vld [vmem:[%s177 + $0xa0] sm:$0xff]
        %v227 = vld [vmem:[%s177 + $0xa8] sm:$0xff]
        %v228 = vld [vmem:[%s177 + $0xb0] sm:$0xff]
        %v229 = vld [vmem:[%s177 + $0xb8] sm:$0xff]
        %v230 = vld [vmem:[#allocation5] sm:$0xff]
        %v231 = vld [vmem:[#allocation5 + $0x8] sm:$0xff]
        %v232 = vld [vmem:[#allocation5 + $0x10] sm:$0xff]
        %v233 = vld [vmem:[#allocation5 + $0x18] sm:$0xff]
        %v234 = vld [vmem:[#allocation5 + $0x20] sm:$0xff]
        %v235 = vld [vmem:[#allocation5 + $0x28] sm:$0xff]
        %v236 = vld [vmem:[#allocation5 + $0x30] sm:$0xff]
        %v237 = vld [vmem:[#allocation5 + $0x38] sm:$0xff]
        %v238 = vld [vmem:[#allocation5 + $0x40] sm:$0xff]
        %v239 = vld [vmem:[#allocation5 + $0x48] sm:$0xff]
        %v240 = vld [vmem:[#allocation5 + $0x50] sm:$0xff]
        %v241 = vld [vmem:[#allocation5 + $0x58] sm:$0xff]
        %v242 = vld [vmem:[#allocation5 + $0x60] sm:$0xff]
        %v243 = vld [vmem:[#allocation5 + $0x68] sm:$0xff]
        %v244 = vld [vmem:[#allocation5 + $0x70] sm:$0xff]
        %v245 = vld [vmem:[#allocation5 + $0x78] sm:$0xff]
        %v246 = vld [vmem:[%s2] sm:$0x1]
        %v248 = vlaneseq
        %v249 = vshrl.u32 %v248, 7
        %v250 = vsub.s32 0, %v249
        %v251 = vrot.slane %v246, %v250
        %253 = vmatprep.subr.mxu0 0.0
        %254 = vmatpush1.xpose.msra.mxu0 %v230
        %255 = vmatprep.subr.mxu0 0.0
        %256 = vmatpush1.xpose.msra.mxu0 %v231
        %257 = vmatprep.subr.mxu0 0.0
        %258 = vmatpush1.xpose.msra.mxu0 %v232
        %259 = vmatprep.subr.mxu0 0.0
        %260 = vmatpush1.xpose.msra.mxu0 %v233
        %261 = vmatprep.subr.mxu0 0.0
        %262 = vmatpush1.xpose.msra.mxu0 %v234
        %263 = vmatprep.subr.mxu0 0.0
        %264 = vmatpush1.xpose.msra.mxu0 %v235
        %265 = vmatprep.subr.mxu0 0.0
        %266 = vmatpush1.xpose.msra.mxu0 %v236
        %267 = vmatprep.subr.mxu0 0.0
        %268 = vmatpush1.xpose.msra.mxu0 %v237
        %269 = vmatprep.subr.mxu0 0.0
        %270 = vmatpush1.xpose.msra.mxu0 %v238
        %271 = vmatprep.subr.mxu0 0.0
        %272 = vmatpush1.xpose.msra.mxu0 %v239
        %273 = vmatprep.subr.mxu0 0.0
        %274 = vmatpush1.xpose.msra.mxu0 %v240
        %275 = vmatprep.subr.mxu0 0.0
        %276 = vmatpush1.xpose.msra.mxu0 %v241
        %277 = vmatprep.subr.mxu0 0.0
        %278 = vmatpush1.xpose.msra.mxu0 %v242
        %279 = vmatprep.subr.mxu0 0.0
        %280 = vmatpush1.xpose.msra.mxu0 %v243
        %281 = vmatprep.subr.mxu0 0.0
        %282 = vmatpush1.xpose.msra.mxu0 %v244
        %283 = vmatprep.subr.mxu0 0.0
        %284 = vmatpush1.xpose.msra.mxu0 %v245
        %285 = vmatprep.subr.mxu0 0.0
        %286 = vmatpush1.xpose.msra.mxu0 0.0
        %287 = vmatprep.subr.mxu0 0.0
        %288 = vmatpush1.xpose.msra.mxu0 0.0
        %289 = vmatprep.subr.mxu0 0.0
        %290 = vmatpush1.xpose.msra.mxu0 0.0
        %291 = vmatprep.subr.mxu0 0.0
        %292 = vmatpush1.xpose.msra.mxu0 0.0
        %293 = vmatprep.subr.mxu0 0.0
        %294 = vmatpush1.xpose.msra.mxu0 0.0
        %295 = vmatprep.subr.mxu0 0.0
        %296 = vmatpush1.xpose.msra.mxu0 0.0
        %297 = vmatprep.subr.mxu0 0.0
        %298 = vmatpush1.xpose.msra.mxu0 0.0
        %299 = vmatprep.subr.mxu0 0.0
        %300 = vmatpush1.xpose.msra.mxu0 0.0
        %301 = vmatprep.subr.mxu0 0.0
        %302 = vmatpush1.xpose.msra.mxu0 0.0
        %303 = vmatprep.subr.mxu0 0.0
        %304 = vmatpush1.xpose.msra.mxu0 0.0
        %305 = vmatprep.subr.mxu0 0.0
        %306 = vmatpush1.xpose.msra.mxu0 0.0
        %307 = vmatprep.subr.mxu0 0.0
        %308 = vmatpush1.xpose.msra.mxu0 0.0
        %309 = vmatprep.subr.mxu0 0.0
        %310 = vmatpush1.xpose.msra.mxu0 0.0
        %311 = vmatprep.subr.mxu0 0.0
        %312 = vmatpush1.xpose.msra.mxu0 0.0
        %313 = vmatprep.subr.mxu0 0.0
        %314 = vmatpush1.xpose.msra.mxu0 0.0
        %315 = vmatprep.subr.mxu0 0.0
        %316 = vmatpush1.xpose.msra.mxu0 0.0
        %317 = vmatprep.mubr.f32.mxu0 0.0
        %318 = vmatmul.mubr.f32.gmra.mrb[0].mxu0 %v206
        %v319 = vpop.f32.mrb[0].mxu0
        %v320 = vadd.f32 %v251, %v319
        %v321 = vpop.f32.mrb[0].mxu0
        %322 = vmatprep.mubr.f32.mxu0 0.0
        %323 = vmatmul.mubr.f32.gmra.mrb[0].mxu0 %v207
        %v324 = vpop.f32.mrb[0].mxu0
        %v325 = vadd.f32 %v251, %v324
        %v326 = vpop.f32.mrb[0].mxu0
        %327 = vmatprep.mubr.f32.mxu0 0.0
        %328 = vmatmul.mubr.f32.gmra.mrb[0].mxu0 %v208
        %v329 = vpop.f32.mrb[0].mxu0
        %v330 = vadd.f32 %v251, %v329
        %v331 = vpop.f32.mrb[0].mxu0
        %332 = vmatprep.mubr.f32.mxu0 0.0
        %333 = vmatmul.mubr.f32.gmra.mrb[0].mxu0 %v209
        %v334 = vpop.f32.mrb[0].mxu0
        %v335 = vadd.f32 %v251, %v334
        %v336 = vpop.f32.mrb[0].mxu0
        %337 = vmatprep.mubr.f32.mxu0 0.0
        %338 = vmatmul.mubr.f32.gmra.mrb[0].mxu0 %v210
        %v339 = vpop.f32.mrb[0].mxu0
        %v340 = vadd.f32 %v251, %v339
        %v341 = vpop.f32.mrb[0].mxu0
        %342 = vmatprep.mubr.f32.mxu0 0.0
        %343 = vmatmul.mubr.f32.gmra.mrb[0].mxu0 %v211
        %v344 = vpop.f32.mrb[0].mxu0
        %v345 = vadd.f32 %v251, %v344
        %v346 = vpop.f32.mrb[0].mxu0
        %347 = vmatprep.mubr.f32.mxu0 0.0
        %348 = vmatmul.mubr.f32.gmra.mrb[0].mxu0 %v212
        %v349 = vpop.f32.mrb[0].mxu0
        %v350 = vadd.f32 %v251, %v349
        %v351 = vpop.f32.mrb[0].mxu0
        %352 = vmatprep.mubr.f32.mxu0 0.0
        %353 = vmatmul.mubr.f32.gmra.mrb[0].mxu0 %v213
        %v354 = vpop.f32.mrb[0].mxu0
        %v355 = vadd.f32 %v251, %v354
        %v356 = vpop.f32.mrb[0].mxu0
        %357 = vmatprep.mubr.f32.mxu0 0.0
        %358 = vmatmul.mubr.f32.gmra.mrb[0].mxu0 %v214
        %v359 = vpop.f32.mrb[0].mxu0
        %v360 = vadd.f32 %v251, %v359
        %v361 = vpop.f32.mrb[0].mxu0
        %362 = vmatprep.mubr.f32.mxu0 0.0
        %363 = vmatmul.mubr.f32.gmra.mrb[0].mxu0 %v215
        %v364 = vpop.f32.mrb[0].mxu0
        %v365 = vadd.f32 %v251, %v364
        %v366 = vpop.f32.mrb[0].mxu0
        %367 = vmatprep.mubr.f32.mxu0 0.0
        %368 = vmatmul.mubr.f32.gmra.mrb[0].mxu0 %v216
        %v369 = vpop.f32.mrb[0].mxu0
        %v370 = vadd.f32 %v251, %v369
        %v371 = vpop.f32.mrb[0].mxu0
        %372 = vmatprep.mubr.f32.mxu0 0.0
        %373 = vmatmul.mubr.f32.gmra.mrb[0].mxu0 %v217
        %v374 = vpop.f32.mrb[0].mxu0
        %v375 = vadd.f32 %v251, %v374
        %v376 = vpop.f32.mrb[0].mxu0
        %377 = vmatprep.mubr.f32.mxu0 0.0
        %378 = vmatmul.mubr.f32.gmra.mrb[0].mxu0 %v218
        %v379 = vpop.f32.mrb[0].mxu0
        %v380 = vadd.f32 %v251, %v379
        %v381 = vpop.f32.mrb[0].mxu0
        %382 = vmatprep.mubr.f32.mxu0 0.0
        %383 = vmatmul.mubr.f32.gmra.mrb[0].mxu0 %v219
        %v384 = vpop.f32.mrb[0].mxu0
        %v385 = vadd.f32 %v251, %v384
        %v386 = vpop.f32.mrb[0].mxu0
        %387 = vmatprep.mubr.f32.mxu0 0.0
        %388 = vmatmul.mubr.f32.gmra.mrb[0].mxu0 %v220
        %v389 = vpop.f32.mrb[0].mxu0
        %v390 = vadd.f32 %v251, %v389
        %v391 = vpop.f32.mrb[0].mxu0
        %392 = vmatprep.mubr.f32.mxu0 0.0
        %393 = vmatmul.mubr.f32.gmra.mrb[0].mxu0 %v221
        %v394 = vpop.f32.mrb[0].mxu0
        %v395 = vadd.f32 %v251, %v394
        %v396 = vpop.f32.mrb[0].mxu0
        %397 = vmatprep.mubr.f32.mxu0 0.0
        %398 = vmatmul.mubr.f32.gmra.mrb[0].mxu0 %v222
        %v399 = vpop.f32.mrb[0].mxu0
        %v400 = vadd.f32 %v251, %v399
        %v401 = vpop.f32.mrb[0].mxu0
        %402 = vmatprep.mubr.f32.mxu0 0.0
        %403 = vmatmul.mubr.f32.gmra.mrb[0].mxu0 %v223
        %v404 = vpop.f32.mrb[0].mxu0
        %v405 = vadd.f32 %v251, %v404
        %v406 = vpop.f32.mrb[0].mxu0
        %407 = vmatprep.mubr.f32.mxu0 0.0
        %408 = vmatmul.mubr.f32.gmra.mrb[0].mxu0 %v224
        %v409 = vpop.f32.mrb[0].mxu0
        %v410 = vadd.f32 %v251, %v409
        %v411 = vpop.f32.mrb[0].mxu0
        %412 = vmatprep.mubr.f32.mxu0 0.0
        %413 = vmatmul.mubr.f32.gmra.mrb[0].mxu0 %v225
        %v414 = vpop.f32.mrb[0].mxu0
        %v415 = vadd.f32 %v251, %v414
        %v416 = vpop.f32.mrb[0].mxu0
        %417 = vmatprep.mubr.f32.mxu0 0.0
        %418 = vmatmul.mubr.f32.gmra.mrb[0].mxu0 %v226
        %v419 = vpop.f32.mrb[0].mxu0
        %v420 = vadd.f32 %v251, %v419
        %v421 = vpop.f32.mrb[0].mxu0
        %422 = vmatprep.mubr.f32.mxu0 0.0
        %423 = vmatmul.mubr.f32.gmra.mrb[0].mxu0 %v227
        %v424 = vpop.f32.mrb[0].mxu0
        %v425 = vadd.f32 %v251, %v424
        %v426 = vpop.f32.mrb[0].mxu0
        %427 = vmatprep.mubr.f32.mxu0 0.0
        %428 = vmatmul.mubr.f32.gmra.mrb[0].mxu0 %v228
        %v429 = vpop.f32.mrb[0].mxu0
        %v430 = vadd.f32 %v251, %v429
        %v431 = vpop.f32.mrb[0].mxu0
        %432 = vmatprep.mubr.f32.mxu0 0.0
        %433 = vmatmul.mubr.f32.gmra.mrb[0].mxu0 %v229
        %v434 = vpop.f32.mrb[0].mxu0
        %v435 = vadd.f32 %v251, %v434
        %v436 = vpop.f32.mrb[0].mxu0
        %437 = vdwg.mxu0
        %438 = vst [vmem:[%s203] sm:$0xff] %v320
        %439 = vst [vmem:[%s203 + $0x8] sm:$0xff] %v325
        %440 = vst [vmem:[%s203 + $0x10] sm:$0xff] %v330
        %441 = vst [vmem:[%s203 + $0x18] sm:$0xff] %v335
        %442 = vst [vmem:[%s203 + $0x20] sm:$0xff] %v340
        %443 = vst [vmem:[%s203 + $0x28] sm:$0xff] %v345
        %444 = vst [vmem:[%s203 + $0x30] sm:$0xff] %v350
        %445 = vst [vmem:[%s203 + $0x38] sm:$0xff] %v355
        %446 = vst [vmem:[%s203 + $0x40] sm:$0xff] %v360
        %447 = vst [vmem:[%s203 + $0x48] sm:$0xff] %v365
        %448 = vst [vmem:[%s203 + $0x50] sm:$0xff] %v370
        %449 = vst [vmem:[%s203 + $0x58] sm:$0xff] %v375
        %450 = vst [vmem:[%s203 + $0x60] sm:$0xff] %v380
        %451 = vst [vmem:[%s203 + $0x68] sm:$0xff] %v385
        %452 = vst [vmem:[%s203 + $0x70] sm:$0xff] %v390
        %453 = vst [vmem:[%s203 + $0x78] sm:$0xff] %v395
        %454 = vst [vmem:[%s203 + $0x80] sm:$0xff] %v400
        %455 = vst [vmem:[%s203 + $0x88] sm:$0xff] %v405
        %456 = vst [vmem:[%s203 + $0x90] sm:$0xff] %v410
        %457 = vst [vmem:[%s203 + $0x98] sm:$0xff] %v415
        %458 = vst [vmem:[%s203 + $0xa0] sm:$0xff] %v420
        %459 = vst [vmem:[%s203 + $0xa8] sm:$0xff] %v425
        %460 = vst [vmem:[%s203 + $0xb0] sm:$0xff] %v430
        %461 = vst [vmem:[%s203 + $0xb8] sm:$0xff] %v435
        %s462 = sand.u32 %s97, 1
        %s463 = scalar_lea.sflag [#allocation4], %s462
        %s464 = sand.u32 %s97, 1
        %s465 = smul.addr %s464, 192
        %s466 = scalar_lea.vmem [#allocation7], %s465
        // Predicated region
        $region41: #{tpu_custom_call.1} parent=31 // pred_check
          %p467 = pneg %p107
        $region42: #{tpu_custom_call.1} parent=31 // pred_check_branch
          %469 = sbr.rel (%p467) target = $region44
        $region43: #{tpu_custom_call.1} parent=31 // pred_region
          %s470 = smul.u32 24, %s21
          %s472 = ssub.s32 3072, 3072
          %473 = vsyncadd %s463, %s472
          %s474 = smul.addr %s470, 128
          %s475 = scalar_lea.hbm %s3, %s474
          %s476 = sshll.u32 %s466, 4
          %s477 = int_to_ptr.vmem [resolvable:$true] %s476
          %482 = dma.vmem_to_hbm [thread:$0]  %s477, 3072, %s475, %s463, 128, 128, 8
        $region44: #{tpu_custom_call.1} parent=31 // pred_fallthru
          _
      $region32: #{tpu_custom_call.1} parent=5 // pred_fallthru
        _
      %p483 = scmp.le.s32.totalorder 2, %s16
      // Predicated region
      $region45: #{tpu_custom_call.1} parent=5 // pred_check
        %p484 = pneg %p483
      $region46: #{tpu_custom_call.1} parent=5 // pred_check_branch
        %486 = sbr.rel (%p484) target = $region48
      $region47: #{tpu_custom_call.1} parent=5 // pred_region
        %s487 = ssub.s32 %s16, 2
        // Predicated region
        $region49: #{tpu_custom_call.1} parent=47 // pred_check
          %p488 = pneg %p113
        $region50: #{tpu_custom_call.1} parent=47 // pred_check_branch
          %490 = sbr.rel (%p488) target = $region52
        $region51: #{tpu_custom_call.1} parent=47 // pred_region
          %s491 = sand.u32 %s98, 1
          %s492 = scalar_lea.sflag [#allocation4], %s491
          %s493 = sand.u32 %s98, 1
          %s494 = smul.addr %s493, 192
          %s495 = scalar_lea.vmem [#allocation7], %s494
          %496 = dma.done %s492, 3072
        $region52: #{tpu_custom_call.1} parent=47 // pred_fallthru
          _
      $region48: #{tpu_custom_call.1} parent=5 // pred_fallthru
        _
    $region6: #{tpu_custom_call.1} parent=1 // loop_footer
      %s20 = sadd.s32 1, %s16
    $region7: #{tpu_custom_call.1} parent=1 // loop_footer_branch
      %15 = sbr.rel target = $region3
    $region8: #{tpu_custom_call.1} parent=1 // loop_exit
      _
    %497 = vsyncpa [#allocation3], 1
    %s498 = scalar_lea.sflag [#allocation3], 1
    %499 = vsyncpa %s498, 1
    %500 = vsyncpa [#allocation6], 1
    %501 = vsyncpa [#allocation4], 1
    %s502 = scalar_lea.sflag [#allocation4], 1
    %503 = vsyncpa %s502, 1

</llo_original>
